<compile_context>
chip_gen: v7x
topology: tpu7x:2x2x1
jax: 0.10.0
libtpu: 0.0.40
codegen_flags: <defaults>
</compile_context>

<pallas_src>
import numpy as np
import jax
import jax.numpy as jnp
from jax.experimental import pallas as pl
from jax.experimental.pallas import tpu as pltpu

# ---------------- config (synthetic, mirrors module __init__ shapes) ----------------
N            = 128                 # number of nodes
DIM_IN       = 16                  # cfg.share.dim_in
DIM_EMB      = 64                  # dim_emb
DIM_PE       = 32                  # pecfg.dim_pe
GPSE_DIM_OUT = 32                  # cfg.share.pt_dim_out
DIM_H        = DIM_EMB - DIM_PE    # output size of linear_x
HIDDEN       = 2 * DIM_PE          # MLP hidden (n_layers = 2, model_type = 'mlp')
BN_EPS       = 1e-5

K1 = GPSE_DIM_OUT + DIM_IN         # packed input width:  [pe | x]      = 48
M1 = HIDDEN + DIM_H                # stage-1 output width [h1_pre | hx] = 96
MAX_TILE_N = 512                   # node rows per grid step for large N


def _gpse_encoder_kernel(p_ref, wa_ref, ba_ref, wb_ref, bb_ref, out_ref):
    """p_ref: [tile_n, K1] packed [pe | x]; out_ref: [tile_n, DIM_EMB] = [hx | pe_enc]."""
    # Stage 1: one MXU matmul produces both the MLP hidden pre-activation and hx.
    z = jnp.dot(p_ref[...], wa_ref[...], preferred_element_type=jnp.float32) + ba_ref[...]
    col1 = jax.lax.broadcasted_iota(jnp.int32, z.shape, 1)
    z = jnp.where(col1 < HIDDEN, jnp.maximum(z, 0.0), z)      # ReLU only on MLP columns

    # Stage 2: one MXU matmul produces the final [hx | h2_pre] tile
    # (hx is routed through an identity block so the output needs a single wide store).
    o = jnp.dot(z, wb_ref[...], preferred_element_type=jnp.float32) + bb_ref[...]
    col2 = jax.lax.broadcasted_iota(jnp.int32, o.shape, 1)
    o = jnp.where(col2 >= DIM_H, jnp.maximum(o, 0.0), o)      # ReLU only on PE columns

    out_ref[...] = o.astype(out_ref.dtype)                    # single full-width store


def _pack_params(p):
    """Host-side fold of BatchNorm into W1/b1 and block-diagonal weight packing.

    Done in float64 so the fold introduces no error; cast to f32 at the end.
    """
    f64 = lambda a: np.asarray(a, np.float64)
    w1, b1 = f64(p["w1"]), f64(p["b1"])        # (GPSE_DIM_OUT, HIDDEN), (1, HIDDEN)
    w2, b2 = f64(p["w2"]), f64(p["b2"])        # (HIDDEN, DIM_PE),      (1, DIM_PE)
    wx, bx = f64(p["wx"]), f64(p["bx"])        # (DIM_IN, DIM_H),       (1, DIM_H)
    gamma, beta = f64(p["bn_gamma"]), f64(p["bn_beta"])
    mean, var = f64(p["bn_mean"]), f64(p["bn_var"])

    # BatchNorm (inference) fold:  pe_bn = pe*scale + (beta - mean*scale)
    scale = gamma / np.sqrt(var + BN_EPS)                        # (1, GPSE_DIM_OUT)
    w1f = scale.T * w1                                           # diag(scale) @ W1
    b1f = b1 + (beta - mean * scale) @ w1                        # (1, HIDDEN)

    # Stage-1 weight: [pe | x] @ blockdiag(W1', Wx) + [b1' | bx] -> [h1_pre | hx]
    wa = np.zeros((K1, M1))
    wa[:GPSE_DIM_OUT, :HIDDEN] = w1f
    wa[GPSE_DIM_OUT:, HIDDEN:] = wx
    ba = np.zeros((1, M1))
    ba[:, :HIDDEN] = b1f
    ba[:, HIDDEN:] = bx

    # Stage-2 weight: [h1 | hx] @ [[0, W2], [I, 0]] + [0 | b2] -> [hx | h2_pre]
    wb = np.zeros((M1, DIM_EMB))
    wb[:HIDDEN, DIM_H:] = w2
    wb[HIDDEN:, :DIM_H] = np.eye(DIM_H)
    bb = np.zeros((1, DIM_EMB))
    bb[:, DIM_H:] = b2

    f32 = lambda a: jnp.asarray(a, jnp.float32)
    return f32(wa), f32(ba), f32(wb), f32(bb)


def _round_up(x, m):
    return ((x + m - 1) // m) * m


def gpse_node_encoder(x, pestat, params):
    """x: [N, DIM_IN], pestat: [N, GPSE_DIM_OUT] -> [N, DIM_EMB] = [linear_x(x) | pe_enc]."""
    n = x.shape[0]
    wa, ba, wb, bb = _pack_params(params)

    # Pack activations on the host: one input array, one BlockSpec, one DMA stream.
    packed = jnp.concatenate([pestat, x], axis=1).astype(jnp.float32)   # [n, K1]

    # Tile sizing: whole batch in one step when small; 512-row tiles for large N
    # (parallel grid axis so v7x's 2 TensorCores can split the work).
    tile_n = min(MAX_TILE_N, _round_up(n, 8))
    n_pad = tile_n * pl.cdiv(n, tile_n)
    if n_pad != n:
        packed = jnp.pad(packed, ((0, n_pad - n), (0, 0)))
    grid = (n_pad // tile_n,)

    full = lambda shape: pl.BlockSpec(shape, lambda i: (0, 0))   # VMEM-resident params

    out = pl.pallas_call(
        _gpse_encoder_kernel,
        out_shape=jax.ShapeDtypeStruct((n_pad, DIM_EMB), jnp.float32),
        grid_spec=pl.GridSpec(
            grid=grid,
            in_specs=[
                pl.BlockSpec((tile_n, K1), lambda i: (i, 0)),   # packed [pe | x] tile
                full((K1, M1)),                                 # stage-1 weight
                full((1, M1)),                                  # stage-1 bias
                full((M1, DIM_EMB)),                            # stage-2 weight
                full((1, DIM_EMB)),                             # stage-2 bias
            ],
            out_specs=pl.BlockSpec((tile_n, DIM_EMB), lambda i: (i, 0)),
        ),
        compiler_params=pltpu.CompilerParams(
            dimension_semantics=("parallel",)),
    )(packed, wa, ba, wb, bb)

    return out[:n]


def _reference(x, pestat, p):
    """Unfused f32 reference (original module structure), high-precision matmuls."""
    hp = jax.lax.Precision.HIGHEST
    pe = (pestat - p["bn_mean"]) / jnp.sqrt(p["bn_var"] + BN_EPS) * p["bn_gamma"] + p["bn_beta"]
    h1 = jnp.maximum(jnp.dot(pe, p["w1"], precision=hp) + p["b1"], 0.0)
    h2 = jnp.maximum(jnp.dot(h1, p["w2"], precision=hp) + p["b2"], 0.0)
    hx = jnp.dot(x, p["wx"], precision=hp) + p["bx"]
    return jnp.concatenate([hx, h2], axis=1)


if __name__ == "__main__":
    key = jax.random.PRNGKey(0)
    ks = jax.random.split(key, 12)

    # Deterministic synthetic parameters (shapes from module __init__).
    params = {
        "wx": jax.random.normal(ks[0], (DIM_IN, DIM_H), jnp.float32) * 0.1,
        "bx": jax.random.normal(ks[1], (1, DIM_H), jnp.float32) * 0.1,
        "bn_gamma": jax.random.normal(ks[2], (1, GPSE_DIM_OUT), jnp.float32) * 0.1 + 1.0,
        "bn_beta": jax.random.normal(ks[3], (1, GPSE_DIM_OUT), jnp.float32) * 0.1,
        "bn_mean": jax.random.normal(ks[4], (1, GPSE_DIM_OUT), jnp.float32) * 0.1,
        "bn_var": jax.nn.softplus(jax.random.normal(ks[5], (1, GPSE_DIM_OUT), jnp.float32)) + 0.5,
        "w1": jax.random.normal(ks[6], (GPSE_DIM_OUT, HIDDEN), jnp.float32) * 0.1,
        "b1": jax.random.normal(ks[7], (1, HIDDEN), jnp.float32) * 0.1,
        "w2": jax.random.normal(ks[8], (HIDDEN, DIM_PE), jnp.float32) * 0.1,
        "b2": jax.random.normal(ks[9], (1, DIM_PE), jnp.float32) * 0.1,
    }

    x = jax.random.normal(ks[10], (N, DIM_IN), jnp.float32)
    pestat = jax.random.normal(ks[11], (N, GPSE_DIM_OUT), jnp.float32)

    out = gpse_node_encoder(x, pestat, params)
    out = jax.block_until_ready(out)

    ref = _reference(x, pestat, params)
    assert out.shape == (N, DIM_EMB)
    # Tolerance covers TPU's default reduced-precision f32 matmul path combined with
    # the host-side BN fold / block-diagonal fusion (which reassociates the matmul
    # chain); a structural bug would produce errors orders of magnitude larger.
    assert jnp.allclose(out, ref, atol=5e-3, rtol=5e-3), "mismatch vs reference"

    print("KERNEL_OK")
</pallas_src>

<mosaic_0001>
module attributes {stable_mosaic.version = 11 : i64} {
  func.func @_gpse_encoder_kernel(%arg0: i32, %arg1: memref<128x48xf32, #tpu.memory_space<vmem>>, %arg2: memref<48x96xf32, #tpu.memory_space<vmem>>, %arg3: memref<1x96xf32, #tpu.memory_space<vmem>>, %arg4: memref<96x64xf32, #tpu.memory_space<vmem>>, %arg5: memref<1x64xf32, #tpu.memory_space<vmem>>, %arg6: memref<128x64xf32, #tpu.memory_space<vmem>>) attributes {dimension_semantics = [#tpu.dimension_semantics<parallel>], iteration_bounds = array<i64: 1>, scalar_prefetch = 0 : i64, scratch_operands = 0 : i64, tpu.core_type = #tpu.core_type<tc>, window_params = [{transform_indices = @transform_0, window_bounds = array<i64: 128, 48>}, {pipeline_mode = #tpu.pipeline_mode<synchronous>, transform_indices = @transform_1, window_bounds = array<i64: 48, 96>}, {pipeline_mode = #tpu.pipeline_mode<synchronous>, transform_indices = @transform_2, window_bounds = array<i64: 1, 96>}, {pipeline_mode = #tpu.pipeline_mode<synchronous>, transform_indices = @transform_3, window_bounds = array<i64: 96, 64>}, {pipeline_mode = #tpu.pipeline_mode<synchronous>, transform_indices = @transform_4, window_bounds = array<i64: 1, 64>}, {transform_indices = @transform_5, window_bounds = array<i64: 128, 64>}]} {
    %c0 = arith.constant 0 : index
    %c0_0 = arith.constant 0 : index
    %0 = vector.load %arg1[%c0, %c0_0] : memref<128x48xf32, #tpu.memory_space<vmem>>, vector<128x48xf32>
    %c0_1 = arith.constant 0 : index
    %c0_2 = arith.constant 0 : index
    %1 = vector.load %arg2[%c0_1, %c0_2] : memref<48x96xf32, #tpu.memory_space<vmem>>, vector<48x96xf32>
    %cst = arith.constant dense<0.000000e+00> : vector<128x96xf32>
    %2 = tpu.matmul %0, %1, %cst {dimension_numbers = #tpu.dot_dimension_numbers<[1], [0], [0], [1], [0, 0, 1, 1], [], []>} : vector<128x48xf32>, vector<48x96xf32>, vector<128x96xf32> -> vector<128x96xf32>
    %c0_3 = arith.constant 0 : index
    %c0_4 = arith.constant 0 : index
    %3 = vector.load %arg3[%c0_3, %c0_4] : memref<1x96xf32, #tpu.memory_space<vmem>>, vector<1x96xf32>
    %4 = vector.broadcast %3 : vector<1x96xf32> to vector<128x96xf32>
    %5 = arith.addf %2, %4 : vector<128x96xf32>
    %6 = tpu.iota {dimensions = array<i32: 1>} : vector<128x96xi32>
    %c64_i32 = arith.constant 64 : i32
    %7 = vector.broadcast %c64_i32 : i32 to vector<128x96xi32>
    %8 = arith.cmpi slt, %6, %7 : vector<128x96xi32>
    %cst_5 = arith.constant 0.000000e+00 : f32
    %9 = vector.broadcast %cst_5 : f32 to vector<128x96xf32>
    %10 = arith.maximumf %5, %9 : vector<128x96xf32>
    %11 = arith.select %8, %10, %5 : vector<128x96xi1>, vector<128x96xf32>
    %c0_6 = arith.constant 0 : index
    %c0_7 = arith.constant 0 : index
    %12 = vector.load %arg4[%c0_6, %c0_7] : memref<96x64xf32, #tpu.memory_space<vmem>>, vector<96x64xf32>
    %cst_8 = arith.constant dense<0.000000e+00> : vector<128x64xf32>
    %13 = tpu.matmul %11, %12, %cst_8 {dimension_numbers = #tpu.dot_dimension_numbers<[1], [0], [0], [1], [0, 0, 1, 1], [], []>} : vector<128x96xf32>, vector<96x64xf32>, vector<128x64xf32> -> vector<128x64xf32>
    %c0_9 = arith.constant 0 : index
    %c0_10 = arith.constant 0 : index
    %14 = vector.load %arg5[%c0_9, %c0_10] : memref<1x64xf32, #tpu.memory_space<vmem>>, vector<1x64xf32>
    %15 = vector.broadcast %14 : vector<1x64xf32> to vector<128x64xf32>
    %16 = arith.addf %13, %15 : vector<128x64xf32>
    %17 = tpu.iota {dimensions = array<i32: 1>} : vector<128x64xi32>
    %c32_i32 = arith.constant 32 : i32
    %18 = vector.broadcast %c32_i32 : i32 to vector<128x64xi32>
    %19 = arith.cmpi sge, %17, %18 : vector<128x64xi32>
    %cst_11 = arith.constant 0.000000e+00 : f32
    %20 = vector.broadcast %cst_11 : f32 to vector<128x64xf32>
    %21 = arith.maximumf %16, %20 : vector<128x64xf32>
    %22 = arith.select %19, %21, %16 : vector<128x64xi1>, vector<128x64xf32>
    %c0_12 = arith.constant 0 : index
    %c0_13 = arith.constant 0 : index
    %23 = vector.load %arg6[%c0_12, %c0_13] : memref<128x64xf32, #tpu.memory_space<vmem>>, vector<128x64xf32>
    tpu.vector_store %arg6[%c0_12, %c0_13], %22 {strides = array<i32>} : memref<128x64xf32, #tpu.memory_space<vmem>>, vector<128x64xf32>,
    return
  }
  func.func @transform_0(%arg0: i32) -> (i32, i32) {
    %c0_i32 = arith.constant 0 : i32
    %c0_i32_0 = arith.constant 0 : i32
    return %arg0, %c0_i32 : i32, i32
  }
  func.func @transform_1(%arg0: i32) -> (i32, i32) {
    %c0_i32 = arith.constant 0 : i32
    %c0_i32_0 = arith.constant 0 : i32
    %c0_i32_1 = arith.constant 0 : i32
    return %c0_i32, %c0_i32_0 : i32, i32
  }
  func.func @transform_2(%arg0: i32) -> (i32, i32) {
    %c0_i32 = arith.constant 0 : i32
    %c0_i32_0 = arith.constant 0 : i32
    %c0_i32_1 = arith.constant 0 : i32
    return %c0_i32, %c0_i32_0 : i32, i32
  }
  func.func @transform_3(%arg0: i32) -> (i32, i32) {
    %c0_i32 = arith.constant 0 : i32
    %c0_i32_0 = arith.constant 0 : i32
    %c0_i32_1 = arith.constant 0 : i32
    return %c0_i32, %c0_i32_0 : i32, i32
  }
  func.func @transform_4(%arg0: i32) -> (i32, i32) {
    %c0_i32 = arith.constant 0 : i32
    %c0_i32_0 = arith.constant 0 : i32
    %c0_i32_1 = arith.constant 0 : i32
    return %c0_i32, %c0_i32_0 : i32, i32
  }
  func.func @transform_5(%arg0: i32) -> (i32, i32) {
    %c0_i32 = arith.constant 0 : i32
    %c0_i32_0 = arith.constant 0 : i32
    return %arg0, %c0_i32 : i32, i32
  }
}

</mosaic_0001>

<llo_original>
// kernel: tpu_custom_call.1
$region0: #{tpu_custom_call.1}
  #allocation0 [shape = 'u32[]', space=smem, size = 0x4, offset = 0x4, fixed_abs, tag = 'smem constant byte address 0x4 - core index']
  #allocation1 [shape = 'u32[144,128]{1,0:T(1,128)}', space=vmem, size = 0x12000, scoped, tag = 'internal scratch']
  %s0 = inlined_call_operand.vmem [shape: f32[128,48], index: 0, kind: input, shape index: {}]
  %s1 = inlined_call_operand.vmem [shape: f32[48,96], index: 1, kind: input, shape index: {}]
  %s2 = inlined_call_operand.vmem [shape: f32[1,96], index: 2, kind: input, shape index: {}]
  %s3 = inlined_call_operand.vmem [shape: f32[96,64], index: 3, kind: input, shape index: {}]
  %s4 = inlined_call_operand.vmem [shape: f32[1,64], index: 4, kind: input, shape index: {}]
  %s5 = inlined_call_operand.vmem [shape: f32[128,64], index: 5, kind: output, shape index: {}]
  %s6 = sld [smem:[#allocation0]]
  $region30: #{tpu_custom_call.1} parent=0
    _
  %s8 = ssub.s32 1, %s6
  %s9 = scalar_select 0, %s8, %s6
  // Predicated region
  $region2: #{tpu_custom_call.1} parent=0 // pred_check
    _
  $region3: #{tpu_custom_call.1} parent=0 // pred_check_branch
    %11 = sbr.rel (0) target = $region5
  $region4: #{tpu_custom_call.1} parent=0 // pred_region
    _
  $region5: #{tpu_custom_call.1} parent=0 // pred_fallthru
    _
  // Predicated region
  $region6: #{tpu_custom_call.1} parent=0 // pred_check
    _
  $region7: #{tpu_custom_call.1} parent=0 // pred_check_branch
    %13 = sbr.rel (0) target = $region9
  $region8: #{tpu_custom_call.1} parent=0 // pred_region
    _
  $region9: #{tpu_custom_call.1} parent=0 // pred_fallthru
    _
  // Predicated region
  $region10: #{tpu_custom_call.1} parent=0 // pred_check
    _
  $region11: #{tpu_custom_call.1} parent=0 // pred_check_branch
    %15 = sbr.rel (0) target = $region13
  $region12: #{tpu_custom_call.1} parent=0 // pred_region
    _
  $region13: #{tpu_custom_call.1} parent=0 // pred_fallthru
    _
  // Predicated region
  $region14: #{tpu_custom_call.1} parent=0 // pred_check
    _
  $region15: #{tpu_custom_call.1} parent=0 // pred_check_branch
    %17 = sbr.rel (0) target = $region17
  $region16: #{tpu_custom_call.1} parent=0 // pred_region
    _
  $region17: #{tpu_custom_call.1} parent=0 // pred_fallthru
    _
  // Predicated region
  $region18: #{tpu_custom_call.1} parent=0 // pred_check
    _
  $region19: #{tpu_custom_call.1} parent=0 // pred_check_branch
    %19 = sbr.rel (0) target = $region21
  $region20: #{tpu_custom_call.1} parent=0 // pred_region
    _
  $region21: #{tpu_custom_call.1} parent=0 // pred_fallthru
    _
  %v20 = vld [vmem:[%s0] sm:$0xff]
  %v21 = vld [vmem:[%s0 + $0x8] sm:$0xff]
  %v22 = vld [vmem:[%s0 + $0x10] sm:$0xff]
  %v23 = vld [vmem:[%s0 + $0x18] sm:$0xff]
  %v24 = vld [vmem:[%s0 + $0x20] sm:$0xff]
  %v25 = vld [vmem:[%s0 + $0x28] sm:$0xff]
  %v26 = vld [vmem:[%s0 + $0x30] sm:$0xff]
  %v27 = vld [vmem:[%s0 + $0x38] sm:$0xff]
  %v28 = vld [vmem:[%s0 + $0x40] sm:$0xff]
  %v29 = vld [vmem:[%s0 + $0x48] sm:$0xff]
  %v30 = vld [vmem:[%s0 + $0x50] sm:$0xff]
  %v31 = vld [vmem:[%s0 + $0x58] sm:$0xff]
  %v32 = vld [vmem:[%s0 + $0x60] sm:$0xff]
  %v33 = vld [vmem:[%s0 + $0x68] sm:$0xff]
  %v34 = vld [vmem:[%s0 + $0x70] sm:$0xff]
  %v35 = vld [vmem:[%s0 + $0x78] sm:$0xff]
  %v36 = vld [vmem:[%s1] sm:$0xff]
  %v37 = vld [vmem:[%s1 + $0x8] sm:$0xff]
  %v38 = vld [vmem:[%s1 + $0x10] sm:$0xff]
  %v39 = vld [vmem:[%s1 + $0x18] sm:$0xff]
  %v40 = vld [vmem:[%s1 + $0x20] sm:$0xff]
  %v41 = vld [vmem:[%s1 + $0x28] sm:$0xff]
  %v42 = vld [vmem:[%s2] sm:$0x1]
  %v44 = vlaneseq
  %v45 = vshrl.u32 %v44, 7
  %v46 = vsub.s32 0, %v45
  %v47 = vrot.slane %v42, %v46
  %vm49 = vcmask 392192
  %v51 = vsel %vm49, %v20, 0
  %v54 = vsel %vm49, %v21, 0
  %v57 = vsel %vm49, %v22, 0
  %v60 = vsel %vm49, %v23, 0
  %v63 = vsel %vm49, %v24, 0
  %v66 = vsel %vm49, %v25, 0
  %v69 = vsel %vm49, %v26, 0
  %v72 = vsel %vm49, %v27, 0
  %v75 = vsel %vm49, %v28, 0
  %v78 = vsel %vm49, %v29, 0
  %v81 = vsel %vm49, %v30, 0
  %v84 = vsel %vm49, %v31, 0
  %v87 = vsel %vm49, %v32, 0
  %v90 = vsel %vm49, %v33, 0
  %v93 = vsel %vm49, %v34, 0
  %v96 = vsel %vm49, %v35, 0
  %98 = vmatprep.subr.mxu0 0.0
  %99 = vmatpush1.msra.mxu0 %v36
  %100 = vmatprep.subr.mxu0 0.0
  %101 = vmatpush1.msra.mxu0 %v37
  %102 = vmatprep.subr.mxu0 0.0
  %103 = vmatpush1.msra.mxu0 %v38
  %104 = vmatprep.subr.mxu0 0.0
  %105 = vmatpush1.msra.mxu0 %v39
  %106 = vmatprep.subr.mxu0 0.0
  %107 = vmatpush1.msra.mxu0 %v40
  %108 = vmatprep.subr.mxu0 0.0
  %109 = vmatpush1.msra.mxu0 %v41
  %110 = vmatprep.subr.mxu0 0.0
  %111 = vmatpush1.msra.mxu0 0.0
  %112 = vmatprep.subr.mxu0 0.0
  %113 = vmatpush1.msra.mxu0 0.0
  %114 = vmatprep.subr.mxu0 0.0
  %115 = vmatpush1.msra.mxu0 0.0
  %116 = vmatprep.subr.mxu0 0.0
  %117 = vmatpush1.msra.mxu0 0.0
  %118 = vmatprep.subr.mxu0 0.0
  %119 = vmatpush1.msra.mxu0 0.0
  %120 = vmatprep.subr.mxu0 0.0
  %121 = vmatpush1.msra.mxu0 0.0
  %122 = vmatprep.subr.mxu0 0.0
  %123 = vmatpush1.msra.mxu0 0.0
  %124 = vmatprep.subr.mxu0 0.0
  %125 = vmatpush1.msra.mxu0 0.0
  %126 = vmatprep.subr.mxu0 0.0
  %127 = vmatpush1.msra.mxu0 0.0
  %128 = vmatprep.subr.mxu0 0.0
  %129 = vmatpush1.msra.mxu0 0.0
  %130 = vmatprep.subr.mxu0 0.0
  %131 = vmatpush1.msra.mxu0 0.0
  %132 = vmatprep.subr.mxu0 0.0
  %133 = vmatpush1.msra.mxu0 0.0
  %134 = vmatprep.subr.mxu0 0.0
  %135 = vmatpush1.msra.mxu0 0.0
  %136 = vmatprep.subr.mxu0 0.0
  %137 = vmatpush1.msra.mxu0 0.0
  %138 = vmatprep.subr.mxu0 0.0
  %139 = vmatpush1.msra.mxu0 0.0
  %140 = vmatprep.subr.mxu0 0.0
  %141 = vmatpush1.msra.mxu0 0.0
  %142 = vmatprep.subr.mxu0 0.0
  %143 = vmatpush1.msra.mxu0 0.0
  %144 = vmatprep.subr.mxu0 0.0
  %145 = vmatpush1.msra.mxu0 0.0
  %146 = vmatprep.subr.mxu0 0.0
  %147 = vmatpush1.msra.mxu0 0.0
  %148 = vmatprep.subr.mxu0 0.0
  %149 = vmatpush1.msra.mxu0 0.0
  %150 = vmatprep.subr.mxu0 0.0
  %151 = vmatpush1.msra.mxu0 0.0
  %152 = vmatprep.subr.mxu0 0.0
  %153 = vmatpush1.msra.mxu0 0.0
  %154 = vmatprep.subr.mxu0 0.0
  %155 = vmatpush1.msra.mxu0 0.0
  %156 = vmatprep.subr.mxu0 0.0
  %157 = vmatpush1.msra.mxu0 0.0
  %158 = vmatprep.subr.mxu0 0.0
  %159 = vmatpush1.msra.mxu0 0.0
  %160 = vmatprep.subr.mxu0 0.0
  %161 = vmatpush1.msra.mxu0 0.0
  %162 = vmatprep.mubr.f32.mxu0 0.0
  %163 = vmatmul.mubr.f32.gmra.mrb[0].mxu0 %v51
  %v164 = vpop.f32.mrb[0].mxu0
  %v165 = vadd.f32 %v47, %v164
  %v166 = vpop.f32.mrb[0].mxu0
  %167 = vmatprep.mubr.f32.mxu0 0.0
  %168 = vmatmul.mubr.f32.gmra.mrb[0].mxu0 %v54
  %v169 = vpop.f32.mrb[0].mxu0
  %v170 = vadd.f32 %v47, %v169
  %v171 = vpop.f32.mrb[0].mxu0
  %172 = vmatprep.mubr.f32.mxu0 0.0
  %173 = vmatmul.mubr.f32.gmra.mrb[0].mxu0 %v57
  %v174 = vpop.f32.mrb[0].mxu0
  %v175 = vadd.f32 %v47, %v174
  %v176 = vpop.f32.mrb[0].mxu0
  %177 = vmatprep.mubr.f32.mxu0 0.0
  %178 = vmatmul.mubr.f32.gmra.mrb[0].mxu0 %v60
  %v179 = vpop.f32.mrb[0].mxu0
  %v180 = vadd.f32 %v47, %v179
  %v181 = vpop.f32.mrb[0].mxu0
  %182 = vmatprep.mubr.f32.mxu0 0.0
  %183 = vmatmul.mubr.f32.gmra.mrb[0].mxu0 %v63
  %v184 = vpop.f32.mrb[0].mxu0
  %v185 = vadd.f32 %v47, %v184
  %v186 = vpop.f32.mrb[0].mxu0
  %187 = vmatprep.mubr.f32.mxu0 0.0
  %188 = vmatmul.mubr.f32.gmra.mrb[0].mxu0 %v66
  %v189 = vpop.f32.mrb[0].mxu0
  %v190 = vadd.f32 %v47, %v189
  %v191 = vpop.f32.mrb[0].mxu0
  %192 = vmatprep.mubr.f32.mxu0 0.0
  %193 = vmatmul.mubr.f32.gmra.mrb[0].mxu0 %v69
  %v194 = vpop.f32.mrb[0].mxu0
  %v195 = vadd.f32 %v47, %v194
  %v196 = vpop.f32.mrb[0].mxu0
  %197 = vmatprep.mubr.f32.mxu0 0.0
  %198 = vmatmul.mubr.f32.gmra.mrb[0].mxu0 %v72
  %v199 = vpop.f32.mrb[0].mxu0
  %v200 = vadd.f32 %v47, %v199
  %v201 = vpop.f32.mrb[0].mxu0
  %202 = vmatprep.mubr.f32.mxu0 0.0
  %203 = vmatmul.mubr.f32.gmra.mrb[0].mxu0 %v75
  %v204 = vpop.f32.mrb[0].mxu0
  %v205 = vadd.f32 %v47, %v204
  %v206 = vpop.f32.mrb[0].mxu0
  %207 = vmatprep.mubr.f32.mxu0 0.0
  %208 = vmatmul.mubr.f32.gmra.mrb[0].mxu0 %v78
  %v209 = vpop.f32.mrb[0].mxu0
  %v210 = vadd.f32 %v47, %v209
  %v211 = vpop.f32.mrb[0].mxu0
  %212 = vmatprep.mubr.f32.mxu0 0.0
  %213 = vmatmul.mubr.f32.gmra.mrb[0].mxu0 %v81
  %v214 = vpop.f32.mrb[0].mxu0
  %v215 = vadd.f32 %v47, %v214
  %v216 = vpop.f32.mrb[0].mxu0
  %217 = vmatprep.mubr.f32.mxu0 0.0
  %218 = vmatmul.mubr.f32.gmra.mrb[0].mxu0 %v84
  %v219 = vpop.f32.mrb[0].mxu0
  %v220 = vadd.f32 %v47, %v219
  %v221 = vpop.f32.mrb[0].mxu0
  %222 = vmatprep.mubr.f32.mxu0 0.0
  %223 = vmatmul.mubr.f32.gmra.mrb[0].mxu0 %v87
  %v224 = vpop.f32.mrb[0].mxu0
  %v225 = vadd.f32 %v47, %v224
  %v226 = vpop.f32.mrb[0].mxu0
  %227 = vmatprep.mubr.f32.mxu0 0.0
  %228 = vmatmul.mubr.f32.gmra.mrb[0].mxu0 %v90
  %v229 = vpop.f32.mrb[0].mxu0
  %v230 = vadd.f32 %v47, %v229
  %v231 = vpop.f32.mrb[0].mxu0
  %232 = vmatprep.mubr.f32.mxu0 0.0
  %233 = vmatmul.mubr.f32.gmra.mrb[0].mxu0 %v93
  %v234 = vpop.f32.mrb[0].mxu0
  %v235 = vadd.f32 %v47, %v234
  %v236 = vpop.f32.mrb[0].mxu0
  %237 = vmatprep.mubr.f32.mxu0 0.0
  %238 = vmatmul.mubr.f32.gmra.mrb[0].mxu0 %v96
  %v239 = vpop.f32.mrb[0].mxu0
  %v240 = vadd.f32 %v47, %v239
  %v241 = vpop.f32.mrb[0].mxu0
  %242 = vdwg.mxu0
  %v243 = vlaneseq
  %v244 = vand.u32 %v243, 127
  %vm245 = vcmp.lt.s32.totalorder %v244, 64
  %v246 = vmax.f32 %v165, 0.0
  %v247 = vmax.f32 %v170, 0.0
  %v248 = vmax.f32 %v175, 0.0
  %v249 = vmax.f32 %v180, 0.0
  %v250 = vmax.f32 %v185, 0.0
  %v251 = vmax.f32 %v190, 0.0
  %v252 = vmax.f32 %v195, 0.0
  %v253 = vmax.f32 %v200, 0.0
  %v254 = vmax.f32 %v205, 0.0
  %v255 = vmax.f32 %v210, 0.0
  %v256 = vmax.f32 %v215, 0.0
  %v257 = vmax.f32 %v220, 0.0
  %v258 = vmax.f32 %v225, 0.0
  %v259 = vmax.f32 %v230, 0.0
  %v260 = vmax.f32 %v235, 0.0
  %v261 = vmax.f32 %v240, 0.0
  %v262 = vsel %vm245, %v246, %v165
  %v263 = vsel %vm245, %v247, %v170
  %v264 = vsel %vm245, %v248, %v175
  %v265 = vsel %vm245, %v249, %v180
  %v266 = vsel %vm245, %v250, %v185
  %v267 = vsel %vm245, %v251, %v190
  %v268 = vsel %vm245, %v252, %v195
  %v269 = vsel %vm245, %v253, %v200
  %v270 = vsel %vm245, %v254, %v205
  %v271 = vsel %vm245, %v255, %v210
  %v272 = vsel %vm245, %v256, %v215
  %v273 = vsel %vm245, %v257, %v220
  %v274 = vsel %vm245, %v258, %v225
  %v275 = vsel %vm245, %v259, %v230
  %v276 = vsel %vm245, %v260, %v235
  %v277 = vsel %vm245, %v261, %v240
  %v278 = vld [vmem:[%s3] sm:$0xff]
  %v279 = vld [vmem:[%s3 + $0x8] sm:$0xff]
  %v280 = vld [vmem:[%s3 + $0x10] sm:$0xff]
  %v281 = vld [vmem:[%s3 + $0x18] sm:$0xff]
  %v282 = vld [vmem:[%s3 + $0x20] sm:$0xff]
  %v283 = vld [vmem:[%s3 + $0x28] sm:$0xff]
  %v284 = vld [vmem:[%s3 + $0x30] sm:$0xff]
  %v285 = vld [vmem:[%s3 + $0x38] sm:$0xff]
  %v286 = vld [vmem:[%s3 + $0x40] sm:$0xff]
  %v287 = vld [vmem:[%s3 + $0x48] sm:$0xff]
  %v288 = vld [vmem:[%s3 + $0x50] sm:$0xff]
  %v289 = vld [vmem:[%s3 + $0x58] sm:$0xff]
  %v290 = vld [vmem:[%s4] sm:$0x1]
  %v292 = vlaneseq
  %v293 = vshrl.u32 %v292, 7
  %v294 = vsub.s32 0, %v293
  %v295 = vrot.slane %v290, %v294
  %vm297 = vcmask 785408
  %v299 = vsel %vm297, %v262, 0
  %v302 = vsel %vm297, %v263, 0
  %v305 = vsel %vm297, %v264, 0
  %v308 = vsel %vm297, %v265, 0
  %v311 = vsel %vm297, %v266, 0
  %v314 = vsel %vm297, %v267, 0
  %v317 = vsel %vm297, %v268, 0
  %v320 = vsel %vm297, %v269, 0
  %v323 = vsel %vm297, %v270, 0
  %v326 = vsel %vm297, %v271, 0
  %v329 = vsel %vm297, %v272, 0
  %v332 = vsel %vm297, %v273, 0
  %v335 = vsel %vm297, %v274, 0
  %v338 = vsel %vm297, %v275, 0
  %v341 = vsel %vm297, %v276, 0
  %v344 = vsel %vm297, %v277, 0
  %346 = vmatprep.subr.mxu0 0.0
  %347 = vmatpush1.msra.mxu0 %v278
  %348 = vmatprep.subr.mxu0 0.0
  %349 = vmatpush1.msra.mxu0 %v279
  %350 = vmatprep.subr.mxu0 0.0
  %351 = vmatpush1.msra.mxu0 %v280
  %352 = vmatprep.subr.mxu0 0.0
  %353 = vmatpush1.msra.mxu0 %v281
  %354 = vmatprep.subr.mxu0 0.0
  %355 = vmatpush1.msra.mxu0 %v282
  %356 = vmatprep.subr.mxu0 0.0
  %357 = vmatpush1.msra.mxu0 %v283
  %358 = vmatprep.subr.mxu0 0.0
  %359 = vmatpush1.msra.mxu0 %v284
  %360 = vmatprep.subr.mxu0 0.0
  %361 = vmatpush1.msra.mxu0 %v285
  %362 = vmatprep.subr.mxu0 0.0
  %363 = vmatpush1.msra.mxu0 %v286
  %364 = vmatprep.subr.mxu0 0.0
  %365 = vmatpush1.msra.mxu0 %v287
  %366 = vmatprep.subr.mxu0 0.0
  %367 = vmatpush1.msra.mxu0 %v288
  %368 = vmatprep.subr.mxu0 0.0
  %369 = vmatpush1.msra.mxu0 %v289
  %370 = vmatprep.subr.mxu0 0.0
  %371 = vmatpush1.msra.mxu0 0.0
  %372 = vmatprep.subr.mxu0 0.0
  %373 = vmatpush1.msra.mxu0 0.0
  %374 = vmatprep.subr.mxu0 0.0
  %375 = vmatpush1.msra.mxu0 0.0
  %376 = vmatprep.subr.mxu0 0.0
  %377 = vmatpush1.msra.mxu0 0.0
  %378 = vmatprep.subr.mxu0 0.0
  %379 = vmatpush1.msra.mxu0 0.0
  %380 = vmatprep.subr.mxu0 0.0
  %381 = vmatpush1.msra.mxu0 0.0
  %382 = vmatprep.subr.mxu0 0.0
  %383 = vmatpush1.msra.mxu0 0.0
  %384 = vmatprep.subr.mxu0 0.0
  %385 = vmatpush1.msra.mxu0 0.0
  %386 = vmatprep.subr.mxu0 0.0
  %387 = vmatpush1.msra.mxu0 0.0
  %388 = vmatprep.subr.mxu0 0.0
  %389 = vmatpush1.msra.mxu0 0.0
  %390 = vmatprep.subr.mxu0 0.0
  %391 = vmatpush1.msra.mxu0 0.0
  %392 = vmatprep.subr.mxu0 0.0
  %393 = vmatpush1.msra.mxu0 0.0
  %394 = vmatprep.subr.mxu0 0.0
  %395 = vmatpush1.msra.mxu0 0.0
  %396 = vmatprep.subr.mxu0 0.0
  %397 = vmatpush1.msra.mxu0 0.0
  %398 = vmatprep.subr.mxu0 0.0
  %399 = vmatpush1.msra.mxu0 0.0
  %400 = vmatprep.subr.mxu0 0.0
  %401 = vmatpush1.msra.mxu0 0.0
  %402 = vmatprep.subr.mxu0 0.0
  %403 = vmatpush1.msra.mxu0 0.0
  %404 = vmatprep.subr.mxu0 0.0
  %405 = vmatpush1.msra.mxu0 0.0
  %406 = vmatprep.subr.mxu0 0.0
  %407 = vmatpush1.msra.mxu0 0.0
  %408 = vmatprep.subr.mxu0 0.0
  %409 = vmatpush1.msra.mxu0 0.0
  %410 = vmatprep.mubr.f32.mxu0 0.0
  %411 = vmatmul.mubr.f32.gmra.mrb[0].mxu0 %v299
  %v412 = vpop.f32.mrb[0].mxu0
  %v413 = vadd.f32 %v295, %v412
  %v414 = vpop.f32.mrb[0].mxu0
  %415 = vmatprep.mubr.f32.mxu0 0.0
  %416 = vmatmul.mubr.f32.gmra.mrb[0].mxu0 %v302
  %v417 = vpop.f32.mrb[0].mxu0
  %v418 = vadd.f32 %v295, %v417
  %v419 = vpop.f32.mrb[0].mxu0
  %420 = vmatprep.mubr.f32.mxu0 0.0
  %421 = vmatmul.mubr.f32.gmra.mrb[0].mxu0 %v305
  %v422 = vpop.f32.mrb[0].mxu0
  %v423 = vadd.f32 %v295, %v422
  %v424 = vpop.f32.mrb[0].mxu0
  %425 = vmatprep.mubr.f32.mxu0 0.0
  %426 = vmatmul.mubr.f32.gmra.mrb[0].mxu0 %v308
  %v427 = vpop.f32.mrb[0].mxu0
  %v428 = vadd.f32 %v295, %v427
  %v429 = vpop.f32.mrb[0].mxu0
  %430 = vmatprep.mubr.f32.mxu0 0.0
  %431 = vmatmul.mubr.f32.gmra.mrb[0].mxu0 %v311
  %v432 = vpop.f32.mrb[0].mxu0
  %v433 = vadd.f32 %v295, %v432
  %v434 = vpop.f32.mrb[0].mxu0
  %435 = vmatprep.mubr.f32.mxu0 0.0
  %436 = vmatmul.mubr.f32.gmra.mrb[0].mxu0 %v314
  %v437 = vpop.f32.mrb[0].mxu0
  %v438 = vadd.f32 %v295, %v437
  %v439 = vpop.f32.mrb[0].mxu0
  %440 = vmatprep.mubr.f32.mxu0 0.0
  %441 = vmatmul.mubr.f32.gmra.mrb[0].mxu0 %v317
  %v442 = vpop.f32.mrb[0].mxu0
  %v443 = vadd.f32 %v295, %v442
  %v444 = vpop.f32.mrb[0].mxu0
  %445 = vmatprep.mubr.f32.mxu0 0.0
  %446 = vmatmul.mubr.f32.gmra.mrb[0].mxu0 %v320
  %v447 = vpop.f32.mrb[0].mxu0
  %v448 = vadd.f32 %v295, %v447
  %v449 = vpop.f32.mrb[0].mxu0
  %450 = vmatprep.mubr.f32.mxu0 0.0
  %451 = vmatmul.mubr.f32.gmra.mrb[0].mxu0 %v323
  %v452 = vpop.f32.mrb[0].mxu0
  %v453 = vadd.f32 %v295, %v452
  %v454 = vpop.f32.mrb[0].mxu0
  %455 = vmatprep.mubr.f32.mxu0 0.0
  %456 = vmatmul.mubr.f32.gmra.mrb[0].mxu0 %v326
  %v457 = vpop.f32.mrb[0].mxu0
  %v458 = vadd.f32 %v295, %v457
  %v459 = vpop.f32.mrb[0].mxu0
  %460 = vmatprep.mubr.f32.mxu0 0.0
  %461 = vmatmul.mubr.f32.gmra.mrb[0].mxu0 %v329
  %v462 = vpop.f32.mrb[0].mxu0
  %v463 = vadd.f32 %v295, %v462
  %v464 = vpop.f32.mrb[0].mxu0
  %465 = vmatprep.mubr.f32.mxu0 0.0
  %466 = vmatmul.mubr.f32.gmra.mrb[0].mxu0 %v332
  %v467 = vpop.f32.mrb[0].mxu0
  %v468 = vadd.f32 %v295, %v467
  %v469 = vpop.f32.mrb[0].mxu0
  %470 = vmatprep.mubr.f32.mxu0 0.0
  %471 = vmatmul.mubr.f32.gmra.mrb[0].mxu0 %v335
  %v472 = vpop.f32.mrb[0].mxu0
  %v473 = vadd.f32 %v295, %v472
  %v474 = vpop.f32.mrb[0].mxu0
  %475 = vmatprep.mubr.f32.mxu0 0.0
  %476 = vmatmul.mubr.f32.gmra.mrb[0].mxu0 %v338
  %v477 = vpop.f32.mrb[0].mxu0
  %v478 = vadd.f32 %v295, %v477
  %v479 = vpop.f32.mrb[0].mxu0
  %480 = vmatprep.mubr.f32.mxu0 0.0
  %481 = vmatmul.mubr.f32.gmra.mrb[0].mxu0 %v341
  %v482 = vpop.f32.mrb[0].mxu0
  %v483 = vadd.f32 %v295, %v482
  %v484 = vpop.f32.mrb[0].mxu0
  %485 = vmatprep.mubr.f32.mxu0 0.0
  %486 = vmatmul.mubr.f32.gmra.mrb[0].mxu0 %v344
  %v487 = vpop.f32.mrb[0].mxu0
  %v488 = vadd.f32 %v295, %v487
  %v489 = vpop.f32.mrb[0].mxu0
  %490 = vdwg.mxu0
  %vm491 = vcmp.ge.s32.totalorder %v244, 32
  %v492 = vmax.f32 %v413, 0.0
  %v493 = vmax.f32 %v418, 0.0
  %v494 = vmax.f32 %v423, 0.0
  %v495 = vmax.f32 %v428, 0.0
  %v496 = vmax.f32 %v433, 0.0
  %v497 = vmax.f32 %v438, 0.0
  %v498 = vmax.f32 %v443, 0.0
  %v499 = vmax.f32 %v448, 0.0
  %v500 = vmax.f32 %v453, 0.0
  %v501 = vmax.f32 %v458, 0.0
  %v502 = vmax.f32 %v463, 0.0
  %v503 = vmax.f32 %v468, 0.0
  %v504 = vmax.f32 %v473, 0.0
  %v505 = vmax.f32 %v478, 0.0
  %v506 = vmax.f32 %v483, 0.0
  %v507 = vmax.f32 %v488, 0.0
  %v508 = vsel %vm491, %v492, %v413
  %v509 = vsel %vm491, %v493, %v418
  %v510 = vsel %vm491, %v494, %v423
  %v511 = vsel %vm491, %v495, %v428
  %v512 = vsel %vm491, %v496, %v433
  %v513 = vsel %vm491, %v497, %v438
  %v514 = vsel %vm491, %v498, %v443
  %v515 = vsel %vm491, %v499, %v448
  %v516 = vsel %vm491, %v500, %v453
  %v517 = vsel %vm491, %v501, %v458
  %v518 = vsel %vm491, %v502, %v463
  %v519 = vsel %vm491, %v503, %v468
  %v520 = vsel %vm491, %v504, %v473
  %v521 = vsel %vm491, %v505, %v478
  %v522 = vsel %vm491, %v506, %v483
  %v523 = vsel %vm491, %v507, %v488
  %vm524 = vcmask 523264
  %525 = vst.msk [vmem:[%s5] sm:$0xff] %vm524, %v508
  %526 = vst.msk [vmem:[%s5 + $0x8] sm:$0xff] %vm524, %v509
  %527 = vst.msk [vmem:[%s5 + $0x10] sm:$0xff] %vm524, %v510
  %528 = vst.msk [vmem:[%s5 + $0x18] sm:$0xff] %vm524, %v511
  %529 = vst.msk [vmem:[%s5 + $0x20] sm:$0xff] %vm524, %v512
  %530 = vst.msk [vmem:[%s5 + $0x28] sm:$0xff] %vm524, %v513
  %531 = vst.msk [vmem:[%s5 + $0x30] sm:$0xff] %vm524, %v514
  %532 = vst.msk [vmem:[%s5 + $0x38] sm:$0xff] %vm524, %v515
  %533 = vst.msk [vmem:[%s5 + $0x40] sm:$0xff] %vm524, %v516
  %534 = vst.msk [vmem:[%s5 + $0x48] sm:$0xff] %vm524, %v517
  %535 = vst.msk [vmem:[%s5 + $0x50] sm:$0xff] %vm524, %v518
  %536 = vst.msk [vmem:[%s5 + $0x58] sm:$0xff] %vm524, %v519
  %537 = vst.msk [vmem:[%s5 + $0x60] sm:$0xff] %vm524, %v520
  %538 = vst.msk [vmem:[%s5 + $0x68] sm:$0xff] %vm524, %v521
  %539 = vst.msk [vmem:[%s5 + $0x70] sm:$0xff] %vm524, %v522
  %540 = vst.msk [vmem:[%s5 + $0x78] sm:$0xff] %vm524, %v523
  // Predicated region
  $region22: #{tpu_custom_call.1} parent=0 // pred_check
    _
  $region23: #{tpu_custom_call.1} parent=0 // pred_check_branch
    %542 = sbr.rel (0) target = $region25
  $region24: #{tpu_custom_call.1} parent=0 // pred_region
    _
  $region25: #{tpu_custom_call.1} parent=0 // pred_fallthru
    _
  // Predicated region
  $region26: #{tpu_custom_call.1} parent=0 // pred_check
    _
  $region27: #{tpu_custom_call.1} parent=0 // pred_check_branch
    %544 = sbr.rel (0) target = $region29
  $region28: #{tpu_custom_call.1} parent=0 // pred_region
    _
  $region29: #{tpu_custom_call.1} parent=0 // pred_fallthru
    _

</llo_original>
